<compile_context>
chip_gen: v5e
topology: v5e:2x2
jax: 0.10.0
libtpu: 0.0.40
codegen_flags: <defaults>
</compile_context>

<pallas_src>
import numpy as np
import jax
import jax.numpy as jnp
from jax.experimental import pallas as pl
from jax.experimental.pallas import tpu as pltpu

# ----- SMPL constants (model_type='smpl') -----
NUM_JOINTS = 24
NUM_POSES = 72                            # 24 joints * 3 (axis-angle)
NUM_SHAPES = 10
NUM_POSE_BASIS = (NUM_JOINTS - 1) * 9     # 207
NUM_COEFF = NUM_SHAPES + NUM_POSE_BASIS   # 217: [betas | pose_feature]; template handled separately

# real SMPL kintree parents (deterministic, built in-script)
SMPL_PARENTS = np.array(
    [-1, 0, 0, 0, 1, 2, 3, 4, 5, 6, 7, 8, 9, 9, 9, 12, 13, 14, 16, 17, 18, 19, 20, 21],
    dtype=np.int64)

# TODO(synk): the smplh/smplx/mano hand-PCA branches of extend_pose and the
# regressor-joints (j_* buffers) branch of forward are config paths not exercised
# by the default smpl forward; they are not implemented here.


def _round_up(x, m):
    return ((x + m - 1) // m) * m


# ---------------- plain-JAX glue: small kinematics ----------------
def batch_rodrigues(rot_vecs):
    """(N,3) axis-angle -> (N,3,3) rotation matrices (matches torch batch_rodrigues)."""
    angle = jnp.linalg.norm(rot_vecs + 1e-8, axis=1, keepdims=True)       # (N,1)
    rot_dir = rot_vecs / angle
    cos = jnp.cos(angle)[:, None, :]                                      # (N,1,1)
    sin = jnp.sin(angle)[:, None, :]
    rx, ry, rz = jnp.split(rot_dir, 3, axis=1)                            # each (N,1)
    zeros = jnp.zeros_like(rx)
    K = jnp.concatenate([zeros, -rz, ry, rz, zeros, -rx, -ry, rx, zeros],
                        axis=1).reshape(-1, 3, 3)
    ident = jnp.eye(3, dtype=rot_vecs.dtype)[None]
    return ident + sin * K + (1.0 - cos) * jnp.matmul(K, K)


def batch_rigid_transform(rot_mats, joints, parents):
    """rot_mats (B,J,3,3), joints (B,J,3) -> posed_joints (B,J,3), rel transforms (B,J,4,4)."""
    B, J = joints.shape[:2]
    joints = joints[..., None]                                            # (B,J,3,1)
    rel_joints = jnp.concatenate(
        [joints[:, :1], joints[:, 1:] - joints[:, parents[1:]]], axis=1)
    top = jnp.concatenate([rot_mats, rel_joints], axis=-1)                # (B,J,3,4)
    bottom = jnp.broadcast_to(
        jnp.array([0.0, 0.0, 0.0, 1.0], dtype=rot_mats.dtype), (B, J, 1, 4))
    transforms_mat = jnp.concatenate([top, bottom], axis=-2)              # (B,J,4,4)

    chain = [transforms_mat[:, 0]]
    for i in range(1, J):
        chain.append(jnp.matmul(chain[int(parents[i])], transforms_mat[:, i]))
    transforms = jnp.stack(chain, axis=1)                                 # (B,J,4,4)

    posed_joints = transforms[:, :, :3, 3]
    joints_homogen = jnp.pad(joints, ((0, 0), (0, 0), (0, 1), (0, 0)))    # (B,J,4,1)
    rel = transforms - jnp.pad(jnp.matmul(transforms, joints_homogen),
                               ((0, 0), (0, 0), (0, 0), (3, 0)))
    return posed_joints, rel


# ---------------- Pallas kernel: fused blend + LBS over one vertex tile ----------------
def smpl_lbs_kernel(coeff_ref, a_ref, dirs_ref, tmpl_ref, w_ref, out_ref):
    f32 = jnp.float32
    tile_v = w_ref.shape[1]
    bp = coeff_ref.shape[0]                                           # B_pad (multiple of 8)

    # ONE fused MXU pass: [betas | pose_feature] against [shapedirs | posedirs], all three
    # channels contiguous along lanes -> (B_pad, 3*tile_v), f32 accumulation.
    blend = jnp.dot(coeff_ref[...], dirs_ref[...], preferred_element_type=f32)
    v = blend + tmpl_ref[...]                                         # f32 template epilogue add

    vx = v[:, 0:tile_v]                                               # lane-aligned static slices
    vy = v[:, tile_v:2 * tile_v]
    vz = v[:, 2 * tile_v:3 * tile_v]

    # blended skinning transforms (global rigid already folded into A on the wrapper side):
    # (12*B_pad, 24) @ (24, tile_v) -> (12*B_pad, tile_v), component-major over batch.
    t_all = jnp.dot(a_ref[...], w_ref[...], preferred_element_type=f32)

    def t(k):  # component k of the blended 3x4 transform, all batches: (B_pad, tile_v)
        return t_all[k * bp:(k + 1) * bp]

    out_ref[0] = (t(0) * vx + t(1) * vy + t(2) * vz + t(3)).astype(out_ref.dtype)
    out_ref[1] = (t(4) * vx + t(5) * vy + t(6) * vz + t(7)).astype(out_ref.dtype)
    out_ref[2] = (t(8) * vx + t(9) * vy + t(10) * vz + t(11)).astype(out_ref.dtype)


# ---------------- buffer preparation (done once, mirrors register_buffer) ----------------
def prepare_smpl_kernel_buffers(buffers, *, tile_v=896, dirs_dtype=jnp.bfloat16,
                                even_tiles=True):
    """Build the fused, vertex-tiled operand layout for the Pallas kernel.

    dirs_dtype=bf16 (default) halves HBM traffic on the dominant streamed buffer; v_template
    is always kept in a separate f32 operand so vertex accuracy stays at f32.  even_tiles
    rounds the vertex-tile count up to an even number so v7x's 2 TensorCores stay balanced.
    """
    assert tile_v % 128 == 0, "tile_v must be a multiple of 128 (lane width)"
    v_template = buffers['v_template']        # (V, 3)
    shapedirs = buffers['shapedirs']          # (V, 3, 10)
    posedirs = buffers['posedirs_orig']       # (V, 3, 207)
    weights = buffers['weights']              # (V, 24)
    J_regressor = buffers['J_regressor']      # (24, V)

    Vn = v_template.shape[0]
    num_tiles = -(-Vn // tile_v)
    if even_tiles and (num_tiles % 2 == 1):
        num_tiles += 1
    V_pad = num_tiles * tile_v

    # the global-rigid fold into A is exact only if skinning-weight rows sum to 1
    row_sum = np.asarray(jax.device_get(jnp.sum(weights, axis=1)))
    assert float(np.max(np.abs(row_sum - 1.0))) < 1e-3, "skinning weights must sum to 1 per vertex"

    K_pad = _round_up(NUM_COEFF, 16)          # 224: sublane-clean K for bf16 (and f32)

    # stacked blend basis (K, 3, V) = [shapedirs | posedirs], then relaid per vertex tile as
    # (K_pad, num_tiles, 3, tile_v) -> (K_pad, num_tiles*3*tile_v) so each tile's DMA is a
    # single contiguous (K_pad, 3*tile_v) block with x/y/z channel slabs adjacent on lanes.
    sd = jnp.transpose(shapedirs, (2, 1, 0))                      # (10, 3, V)
    pd = jnp.transpose(posedirs, (2, 1, 0))                       # (207, 3, V)
    dirs = jnp.concatenate([sd, pd], axis=0)                      # (217, 3, V)
    dirs = jnp.pad(dirs, ((0, K_pad - NUM_COEFF), (0, 0), (0, V_pad - Vn)))
    dirs = dirs.reshape(K_pad, 3, num_tiles, tile_v)
    dirs = jnp.transpose(dirs, (0, 2, 1, 3)).reshape(K_pad, num_tiles * 3 * tile_v)
    dirs = dirs.astype(dirs_dtype)

    # v_template kept in f32 (needs mm-level absolute accuracy), same lane layout, 1 row
    vt = jnp.pad(jnp.transpose(v_template, (1, 0)), ((0, 0), (0, V_pad - Vn)))  # (3, V_pad)
    vt = vt.reshape(3, num_tiles, tile_v)
    vt = jnp.transpose(vt, (1, 0, 2)).reshape(1, num_tiles * 3 * tile_v).astype(jnp.float32)

    wT = jnp.pad(weights.T, ((0, 0), (0, V_pad - Vn))).astype(jnp.float32)      # (24, V_pad)

    # precontract J_regressor with the shape basis so joint regression never touches (B,V,3)
    J_template = jnp.matmul(J_regressor, v_template)              # (24, 3)
    J_dirs = jnp.einsum('jv,vcl->jcl', J_regressor, shapedirs)    # (24, 3, 10)

    return dict(dirs=dirs, tmpl=vt, wT=wT, J_template=J_template, J_dirs=J_dirs,
                parents=buffers['parents'], nVertices=Vn, V_pad=V_pad, tile_v=tile_v,
                num_tiles=num_tiles, K_pad=K_pad)


# ---------------- forward: equivalent of SMPLlayer.forward(poses, shapes, Rh, Th) ----------------
def _smpl_forward_impl(poses, shapes, Rh, Th, kb):
    dtype = jnp.float32
    B = poses.shape[0]
    B_pad = _round_up(max(B, 1), 8)
    Vn, tile_v = kb['nVertices'], kb['tile_v']
    num_tiles, K_pad, V_pad = kb['num_tiles'], kb['K_pad'], kb['V_pad']
    parents = kb['parents']

    # --- small kinematics (glue, fuses under jit) ---
    rot = batch_rodrigues(Rh)                                              # (B,3,3)
    rot_mats = batch_rodrigues(poses.reshape(-1, 3)).reshape(B, NUM_JOINTS, 3, 3)
    ident = jnp.eye(3, dtype=dtype)
    pose_feature = (rot_mats[:, 1:] - ident).reshape(B, NUM_POSE_BASIS)    # (B,207)

    # joint locations from the shaped template (precontracted regressor)
    J = kb['J_template'][None] + jnp.einsum('bl,jcl->bjc', shapes, kb['J_dirs'])  # (B,24,3)
    _, A = batch_rigid_transform(rot_mats, J, parents)                     # (B,24,4,4)

    # fold the global rigid transform G = [[R, Th],[0,0,0,1]] into every joint transform
    # (skinning weights sum to 1, so this is identical to applying R, Th after LBS)
    g_top = jnp.concatenate([rot, Th[:, :, None]], axis=-1)                # (B,3,4)
    g_bot = jnp.broadcast_to(jnp.array([0.0, 0.0, 0.0, 1.0], dtype), (B, 1, 4))
    G = jnp.concatenate([g_top, g_bot], axis=1)                            # (B,4,4)
    A_full = jnp.matmul(G[:, None], A)                                     # (B,24,4,4)

    # skinning-matmul LHS: component-major (12, B_pad, 24) -> (12*B_pad, 24)
    A12 = A_full[:, :, :3, :].reshape(B, NUM_JOINTS, 12)                   # (B,24,12)
    a_cm = jnp.transpose(A12, (2, 0, 1))                                   # (12,B,24)
    a_cm = jnp.pad(a_cm, ((0, 0), (0, B_pad - B), (0, 0))).reshape(12 * B_pad, NUM_JOINTS)
    a_cm = a_cm.astype(dtype)

    # fused blend coefficients: [betas | pose_feature], padded to (B_pad, K_pad)
    coeff = jnp.concatenate([shapes, pose_feature], axis=1)                # (B, 217)
    coeff = jnp.pad(coeff, ((0, B_pad - B), (0, K_pad - NUM_COEFF)))
    coeff = coeff.astype(kb['dirs'].dtype)

    # VMEM budget: 2x-buffered streamed tiles + grid-invariant operands + intermediates,
    # 2x safety margin, capped at 48 MiB (below v7x's 64 MiB physical per TC).
    item = jnp.dtype(kb['dirs'].dtype).itemsize
    streamed = (K_pad * 3 * tile_v * item          # dirs tile
                + 3 * tile_v * 4                   # template tile
                + NUM_JOINTS * tile_v * 4          # weights tile
                + 3 * B_pad * tile_v * 4)          # output tile
    invariant = B_pad * K_pad * item + 12 * B_pad * NUM_JOINTS * 4
    interm = (12 * B_pad * tile_v + 3 * B_pad * tile_v) * 4    # t_all + v
    vmem_limit = int(min(48 * 2**20,
                         max(32 * 2**20, 2 * (2 * (streamed + invariant) + interm))))

    out = pl.pallas_call(
        smpl_lbs_kernel,
        out_shape=jax.ShapeDtypeStruct((3, B_pad, V_pad), jnp.float32),
        grid=(num_tiles,),
        in_specs=[
            # small, grid-invariant per-batch operands (index never changes)
            pl.BlockSpec((B_pad, K_pad), lambda i: (0, 0)),
            pl.BlockSpec((12 * B_pad, NUM_JOINTS), lambda i: (0, 0)),
            # large buffers streamed per vertex tile (single contiguous block each)
            pl.BlockSpec((K_pad, 3 * tile_v), lambda i: (0, i)),
            pl.BlockSpec((1, 3 * tile_v), lambda i: (0, i)),
            pl.BlockSpec((NUM_JOINTS, tile_v), lambda i: (0, i)),
        ],
        out_specs=pl.BlockSpec((3, B_pad, tile_v), lambda i: (0, 0, i)),
        compiler_params=pltpu.CompilerParams(
            dimension_semantics=("parallel",),     # vertex tiles shard across v7x's 2 TCs
            vmem_limit_bytes=vmem_limit),
    )(coeff, a_cm, kb['dirs'], kb['tmpl'], kb['wT'])

    # back to the PyTorch (B, V, 3) convention (drop batch/vertex padding first)
    return jnp.transpose(out[:, :B, :Vn], (1, 2, 0))


def make_smpl_forward(kb):
    """Jitted forward closing over the prepared buffers (kinematics + kernel + relayout fuse)."""
    @jax.jit
    def fwd(poses, shapes, Rh, Th):
        return _smpl_forward_impl(poses, shapes, Rh, Th, kb)
    return fwd


# ---------------- pure-JAX reference (mirrors torch lbs) for a sanity check ----------------
def smpl_forward_ref(poses, shapes, Rh, Th, buffers):
    v_template = buffers['v_template']
    shapedirs = buffers['shapedirs']
    posedirs_orig = buffers['posedirs_orig']
    J_regressor = buffers['J_regressor']
    weights = buffers['weights']
    parents = buffers['parents']

    B = poses.shape[0]
    Vn = v_template.shape[0]

    rot = batch_rodrigues(Rh)
    blend = jnp.einsum('bl,vcl->bvc', shapes, shapedirs)
    v_shaped = v_template[None] + blend
    J = jnp.einsum('jv,bvc->bjc', J_regressor, v_shaped)

    rot_mats = batch_rodrigues(poses.reshape(-1, 3)).reshape(B, NUM_JOINTS, 3, 3)
    ident = jnp.eye(3, dtype=poses.dtype)
    pose_feature = (rot_mats[:, 1:] - ident).reshape(B, -1)

    # posedirs registered buffer layout: (207, V*3) = reshape(V*3, 207).T
    posedirs_buf = posedirs_orig.reshape(Vn * 3, NUM_POSE_BASIS).T
    pose_offsets = jnp.matmul(pose_feature, posedirs_buf).reshape(B, Vn, 3)
    v_posed = v_shaped + pose_offsets

    _, A = batch_rigid_transform(rot_mats, J, parents)
    T = jnp.einsum('vj,bjk->bvk', weights, A.reshape(B, NUM_JOINTS, 16)).reshape(B, Vn, 4, 4)
    homo = jnp.concatenate([v_posed, jnp.ones((B, Vn, 1), v_posed.dtype)], axis=-1)[..., None]
    verts = jnp.matmul(T, homo)[:, :, :3, 0]

    verts = jnp.matmul(verts, jnp.transpose(rot, (0, 2, 1))) + Th[:, None, :]
    return verts


if __name__ == "__main__":
    key = jax.random.PRNGKey(0)
    ks = jax.random.split(key, 9)
    B = 2
    Vn = 300          # toy vertex count (real SMPL: 6890); deliberately not a tile multiple
    TILE_V = 128      # small tile so the toy problem exercises the multi-tile grid path

    # deterministic synthetic SMPL buffers (shapes as in the real model, V shrunk)
    v_template = jax.random.normal(ks[0], (Vn, 3), jnp.float32)
    shapedirs = 0.03 * jax.random.normal(ks[1], (Vn, 3, NUM_SHAPES), jnp.float32)
    posedirs_orig = 0.01 * jax.random.normal(ks[2], (Vn, 3, NUM_POSE_BASIS), jnp.float32)
    J_regressor = jax.nn.softmax(jax.random.normal(ks[3], (NUM_JOINTS, Vn), jnp.float32), axis=-1)
    weights = jax.nn.softmax(2.0 * jax.random.normal(ks[4], (Vn, NUM_JOINTS), jnp.float32), axis=-1)

    buffers = dict(v_template=v_template, shapedirs=shapedirs,
                   posedirs_orig=posedirs_orig, J_regressor=J_regressor,
                   weights=weights, parents=SMPL_PARENTS)

    # forward inputs (poses (n,72), shapes (n,10), Rh (n,3), Th (n,3))
    poses = 0.2 * jax.random.normal(ks[5], (B, NUM_POSES), jnp.float32)
    shapes = jax.random.normal(ks[6], (B, NUM_SHAPES), jnp.float32)
    Rh = 0.3 * jax.random.normal(ks[7], (B, 3), jnp.float32)
    Th = jax.random.normal(ks[8], (B, 3), jnp.float32)

    ref = smpl_forward_ref(poses, shapes, Rh, Th, buffers)

    # f32 dirs path: tight check against the torch-equivalent reference
    kb_f32 = prepare_smpl_kernel_buffers(buffers, tile_v=TILE_V, dirs_dtype=jnp.float32)
    fwd_f32 = make_smpl_forward(kb_f32)
    verts_f32 = jax.block_until_ready(fwd_f32(poses, shapes, Rh, Th))
    assert verts_f32.shape == (B, Vn, 3) and verts_f32.dtype == jnp.float32
    err_f32 = float(jnp.max(jnp.abs(verts_f32 - ref)))
    assert err_f32 < 5e-3, f"f32 path max abs err vs reference: {err_f32}"

    # default bf16 dirs path (bandwidth-optimized; template stays f32): looser check
    kb_bf16 = prepare_smpl_kernel_buffers(buffers, tile_v=TILE_V, dirs_dtype=jnp.bfloat16)
    fwd_bf16 = make_smpl_forward(kb_bf16)
    verts_bf16 = jax.block_until_ready(fwd_bf16(poses, shapes, Rh, Th))
    assert verts_bf16.shape == (B, Vn, 3) and verts_bf16.dtype == jnp.float32
    err_bf16 = float(jnp.max(jnp.abs(verts_bf16 - ref)))
    assert err_bf16 < 2e-2, f"bf16 path max abs err vs reference: {err_bf16}"

    print("KERNEL_OK")
</pallas_src>

<mosaic_0001>
module attributes {stable_mosaic.version = 11 : i64} {
  func.func @smpl_lbs_kernel(%arg0: i32, %arg1: memref<8x224xf32, #tpu.memory_space<vmem>>, %arg2: memref<96x24xf32, #tpu.memory_space<vmem>>, %arg3: memref<224x384xf32, #tpu.memory_space<vmem>>, %arg4: memref<1x384xf32, #tpu.memory_space<vmem>>, %arg5: memref<24x128xf32, #tpu.memory_space<vmem>>, %arg6: memref<3x8x128xf32, #tpu.memory_space<vmem>>) attributes {dimension_semantics = [#tpu.dimension_semantics<parallel>], iteration_bounds = array<i64: 4>, scalar_prefetch = 0 : i64, scratch_operands = 0 : i64, tpu.core_type = #tpu.core_type<tc>, window_params = [{pipeline_mode = #tpu.pipeline_mode<synchronous>, transform_indices = @transform_0, window_bounds = array<i64: 8, 224>}, {pipeline_mode = #tpu.pipeline_mode<synchronous>, transform_indices = @transform_1, window_bounds = array<i64: 96, 24>}, {transform_indices = @transform_2, window_bounds = array<i64: 224, 384>}, {transform_indices = @transform_3, window_bounds = array<i64: 1, 384>}, {transform_indices = @transform_4, window_bounds = array<i64: 24, 128>}, {transform_indices = @transform_5, window_bounds = array<i64: 3, 8, 128>}]} {
    %c0 = arith.constant 0 : index
    %c0_0 = arith.constant 0 : index
    %0 = vector.load %arg1[%c0, %c0_0] : memref<8x224xf32, #tpu.memory_space<vmem>>, vector<8x224xf32>
    %c0_1 = arith.constant 0 : index
    %c0_2 = arith.constant 0 : index
    %1 = vector.load %arg3[%c0_1, %c0_2] : memref<224x384xf32, #tpu.memory_space<vmem>>, vector<224x384xf32>
    %cst = arith.constant dense<0.000000e+00> : vector<8x384xf32>
    %2 = tpu.matmul %0, %1, %cst {dimension_numbers = #tpu.dot_dimension_numbers<[1], [0], [0], [1], [0, 0, 1, 1], [], []>} : vector<8x224xf32>, vector<224x384xf32>, vector<8x384xf32> -> vector<8x384xf32>
    %c0_3 = arith.constant 0 : index
    %c0_4 = arith.constant 0 : index
    %3 = vector.load %arg4[%c0_3, %c0_4] : memref<1x384xf32, #tpu.memory_space<vmem>>, vector<1x384xf32>
    %4 = vector.broadcast %3 : vector<1x384xf32> to vector<8x384xf32>
    %5 = arith.addf %2, %4 : vector<8x384xf32>
    %6 = vector.extract_strided_slice %5 {offsets = [0, 0], sizes = [8, 128], strides = [1, 1]} : vector<8x384xf32> to vector<8x128xf32>
    %7 = vector.extract_strided_slice %5 {offsets = [0, 128], sizes = [8, 128], strides = [1, 1]} : vector<8x384xf32> to vector<8x128xf32>
    %8 = vector.extract_strided_slice %5 {offsets = [0, 256], sizes = [8, 128], strides = [1, 1]} : vector<8x384xf32> to vector<8x128xf32>
    %c0_5 = arith.constant 0 : index
    %c0_6 = arith.constant 0 : index
    %9 = vector.load %arg2[%c0_5, %c0_6] : memref<96x24xf32, #tpu.memory_space<vmem>>, vector<96x24xf32>
    %c0_7 = arith.constant 0 : index
    %c0_8 = arith.constant 0 : index
    %10 = vector.load %arg5[%c0_7, %c0_8] : memref<24x128xf32, #tpu.memory_space<vmem>>, vector<24x128xf32>
    %cst_9 = arith.constant dense<0.000000e+00> : vector<96x128xf32>
    %11 = tpu.matmul %9, %10, %cst_9 {dimension_numbers = #tpu.dot_dimension_numbers<[1], [0], [0], [1], [0, 0, 1, 1], [], []>} : vector<96x24xf32>, vector<24x128xf32>, vector<96x128xf32> -> vector<96x128xf32>
    %12 = vector.extract_strided_slice %11 {offsets = [0, 0], sizes = [8, 128], strides = [1, 1]} : vector<96x128xf32> to vector<8x128xf32>
    %13 = arith.mulf %12, %6 : vector<8x128xf32>
    %14 = vector.extract_strided_slice %11 {offsets = [8, 0], sizes = [8, 128], strides = [1, 1]} : vector<96x128xf32> to vector<8x128xf32>
    %15 = arith.mulf %14, %7 : vector<8x128xf32>
    %16 = arith.addf %13, %15 : vector<8x128xf32>
    %17 = vector.extract_strided_slice %11 {offsets = [16, 0], sizes = [8, 128], strides = [1, 1]} : vector<96x128xf32> to vector<8x128xf32>
    %18 = arith.mulf %17, %8 : vector<8x128xf32>
    %19 = arith.addf %16, %18 : vector<8x128xf32>
    %20 = vector.extract_strided_slice %11 {offsets = [24, 0], sizes = [8, 128], strides = [1, 1]} : vector<96x128xf32> to vector<8x128xf32>
    %21 = arith.addf %19, %20 : vector<8x128xf32>
    %c0_10 = arith.constant 0 : index
    %c0_11 = arith.constant 0 : index
    %c0_12 = arith.constant 0 : index
    %22 = vector.load %arg6[%c0_10, %c0_11, %c0_12] : memref<3x8x128xf32, #tpu.memory_space<vmem>>, vector<1x8x128xf32>
    %23 = vector.shape_cast %22 : vector<1x8x128xf32> to vector<8x128xf32>
    %24 = vector.shape_cast %21 : vector<8x128xf32> to vector<1x8x128xf32>
    tpu.vector_store %arg6[%c0_10, %c0_11, %c0_12], %24 {strides = array<i32>} : memref<3x8x128xf32, #tpu.memory_space<vmem>>, vector<1x8x128xf32>,
    %25 = vector.extract_strided_slice %11 {offsets = [32, 0], sizes = [8, 128], strides = [1, 1]} : vector<96x128xf32> to vector<8x128xf32>
    %26 = arith.mulf %25, %6 : vector<8x128xf32>
    %27 = vector.extract_strided_slice %11 {offsets = [40, 0], sizes = [8, 128], strides = [1, 1]} : vector<96x128xf32> to vector<8x128xf32>
    %28 = arith.mulf %27, %7 : vector<8x128xf32>
    %29 = arith.addf %26, %28 : vector<8x128xf32>
    %30 = vector.extract_strided_slice %11 {offsets = [48, 0], sizes = [8, 128], strides = [1, 1]} : vector<96x128xf32> to vector<8x128xf32>
    %31 = arith.mulf %30, %8 : vector<8x128xf32>
    %32 = arith.addf %29, %31 : vector<8x128xf32>
    %33 = vector.extract_strided_slice %11 {offsets = [56, 0], sizes = [8, 128], strides = [1, 1]} : vector<96x128xf32> to vector<8x128xf32>
    %34 = arith.addf %32, %33 : vector<8x128xf32>
    %c1 = arith.constant 1 : index
    %c0_13 = arith.constant 0 : index
    %c0_14 = arith.constant 0 : index
    %35 = vector.load %arg6[%c1, %c0_13, %c0_14] : memref<3x8x128xf32, #tpu.memory_space<vmem>>, vector<1x8x128xf32>
    %36 = vector.shape_cast %35 : vector<1x8x128xf32> to vector<8x128xf32>
    %37 = vector.shape_cast %34 : vector<8x128xf32> to vector<1x8x128xf32>
    tpu.vector_store %arg6[%c1, %c0_13, %c0_14], %37 {strides = array<i32>} : memref<3x8x128xf32, #tpu.memory_space<vmem>>, vector<1x8x128xf32>,
    %38 = vector.extract_strided_slice %11 {offsets = [64, 0], sizes = [8, 128], strides = [1, 1]} : vector<96x128xf32> to vector<8x128xf32>
    %39 = arith.mulf %38, %6 : vector<8x128xf32>
    %40 = vector.extract_strided_slice %11 {offsets = [72, 0], sizes = [8, 128], strides = [1, 1]} : vector<96x128xf32> to vector<8x128xf32>
    %41 = arith.mulf %40, %7 : vector<8x128xf32>
    %42 = arith.addf %39, %41 : vector<8x128xf32>
    %43 = vector.extract_strided_slice %11 {offsets = [80, 0], sizes = [8, 128], strides = [1, 1]} : vector<96x128xf32> to vector<8x128xf32>
    %44 = arith.mulf %43, %8 : vector<8x128xf32>
    %45 = arith.addf %42, %44 : vector<8x128xf32>
    %46 = vector.extract_strided_slice %11 {offsets = [88, 0], sizes = [8, 128], strides = [1, 1]} : vector<96x128xf32> to vector<8x128xf32>
    %47 = arith.addf %45, %46 : vector<8x128xf32>
    %c2 = arith.constant 2 : index
    %c0_15 = arith.constant 0 : index
    %c0_16 = arith.constant 0 : index
    %48 = vector.load %arg6[%c2, %c0_15, %c0_16] : memref<3x8x128xf32, #tpu.memory_space<vmem>>, vector<1x8x128xf32>
    %49 = vector.shape_cast %48 : vector<1x8x128xf32> to vector<8x128xf32>
    %50 = vector.shape_cast %47 : vector<8x128xf32> to vector<1x8x128xf32>
    tpu.vector_store %arg6[%c2, %c0_15, %c0_16], %50 {strides = array<i32>} : memref<3x8x128xf32, #tpu.memory_space<vmem>>, vector<1x8x128xf32>,
    return
  }
  func.func @transform_0(%arg0: i32) -> (i32, i32) {
    %c0_i32 = arith.constant 0 : i32
    %c0_i32_0 = arith.constant 0 : i32
    %c0_i32_1 = arith.constant 0 : i32
    return %c0_i32, %c0_i32_0 : i32, i32
  }
  func.func @transform_1(%arg0: i32) -> (i32, i32) {
    %c0_i32 = arith.constant 0 : i32
    %c0_i32_0 = arith.constant 0 : i32
    %c0_i32_1 = arith.constant 0 : i32
    return %c0_i32, %c0_i32_0 : i32, i32
  }
  func.func @transform_2(%arg0: i32) -> (i32, i32) {
    %c0_i32 = arith.constant 0 : i32
    %c0_i32_0 = arith.constant 0 : i32
    return %c0_i32, %arg0 : i32, i32
  }
  func.func @transform_3(%arg0: i32) -> (i32, i32) {
    %c0_i32 = arith.constant 0 : i32
    %c0_i32_0 = arith.constant 0 : i32
    return %c0_i32, %arg0 : i32, i32
  }
  func.func @transform_4(%arg0: i32) -> (i32, i32) {
    %c0_i32 = arith.constant 0 : i32
    %c0_i32_0 = arith.constant 0 : i32
    return %c0_i32, %arg0 : i32, i32
  }
  func.func @transform_5(%arg0: i32) -> (i32, i32, i32) {
    %c0_i32 = arith.constant 0 : i32
    %c0_i32_0 = arith.constant 0 : i32
    %c0_i32_1 = arith.constant 0 : i32
    return %c0_i32, %c0_i32_0, %arg0 : i32, i32, i32
  }
}

</mosaic_0001>

<llo_original>
// kernel: fwd.1
$region0: #{fwd.1}
  #allocation0 [shape = 'u32[]', space=smem, size = 0x4, offset = 0x4, fixed_abs, tag = 'smem constant byte address 0x4 - core index']
  #allocation1 [shape = 'u32[72,128]{1,0:T(1,128)}', space=vmem, size = 0x9000, scoped, tag = 'internal scratch']
  %s0 = inlined_call_operand.vmem [shape: f32[8,224], index: 0, kind: input, shape index: {}]
  %s1 = inlined_call_operand.vmem [shape: f32[96,24], index: 1, kind: input, shape index: {}]
  %s2 = inlined_call_operand.vmem [shape: f32[224,1536], index: 2, kind: input, shape index: {}]
  %s3 = inlined_call_operand.vmem [shape: f32[1,1536], index: 3, kind: input, shape index: {}]
  %s4 = inlined_call_operand.vmem [shape: f32[24,512], index: 4, kind: input, shape index: {}]
  %s5 = inlined_call_operand.vmem [shape: f32[3,8,512], index: 5, kind: output, shape index: {}]
  %s6 = sld [smem:[#allocation0]]
  $region148: #{fwd.1} parent=0
    _
  %s8 = ssub.s32 1, %s6
  %s9 = scalar_select 0, %s8, %s6
  $region1: #{fwd.1} parent=0
    #allocation2 [shape = 'u8[688128]{0}', space=vmem, size = 0xa8000, scoped, tag = 'input window, operand 2']
    #allocation3 [shape = 'u8[24576]{0}', space=vmem, size = 0x6000, scoped, tag = 'input window, operand 4']
    #allocation4 [shape = 'u8[24576]{0}', space=vmem, size = 0x6000, scoped, tag = 'output window, operand 0']
    loop: start=0, step=1, limit=6
    $region2: #{fwd.1} parent=1 // loop_pre_header
      _
    $region3: #{fwd.1} parent=1 // loop_header
      %s11 = sphi 0, %s15
      %p12 = scmp.ge.s32.totalorder %s11, 6
      %s19 = sphi 0, %s19
      %s21 = sphi 0, %s19
      %s22 = sphi 0, %s21
      %s36 = sphi 0, %s22
      %s40 = sphi 0, %s40
      %s42 = sphi 0, %s40
      %s43 = sphi 0, %s42
      %s57 = sphi 0, %s43
      %s63 = sphi 0, %s65
      %s66 = sphi 0, %s63
      %s67 = sphi 0, %s66
      %s83 = sphi 0, %s67
      %s89 = sphi 0, %s91
      %s92 = sphi 0, %s89
      %s93 = sphi 0, %s92
      %s109 = sphi 0, %s93
      %s115 = sphi 0, %s117
      %s118 = sphi 0, %s115
      %s119 = sphi 0, %s118
      %s135 = sphi 0, %s119
      %s141 = sphi 0, %s143
      %s144 = sphi 0, %s141
      %s145 = sphi 0, %s144
      %s161 = sphi 0, %s145
    $region4: #{fwd.1} parent=1 // loop_header_branch
      %14 = sbr.rel (%p12) target = $region8
    $region5: #{fwd.1} parent=1 // loop_body
      %s16 = ssub.s32 %s11, 1
      %s17 = ssub.s32 %s11, 2
      %s18 = sadd.s32 %s11, 1
      %s20 = sadd.s32 %s19, 1
      %p23 = scmp.eq.s32.totalorder %s11, 3
      %p24 = scmp.ne.s32.totalorder %s19, %s21
      %p25 = scmp.eq.s32.totalorder %s11, 0
      %p26 = por %p24, %p25
      %p27 = scmp.ne.s32.totalorder %s19, %s21
      %p28 = scmp.eq.s32.totalorder %s16, 3
      %p29 = por %p27, %p28
      %p30 = scmp.ne.s32.totalorder %s21, %s22
      %p31 = scmp.eq.s32.totalorder %s16, 0
      %p32 = por %p30, %p31
      %p33 = scmp.ne.s32.totalorder %s21, %s22
      %p34 = scmp.eq.s32.totalorder %s17, 3
      %p35 = por %p33, %p34
      %p37 = scmp.ne.s32.totalorder %s22, %s36
      %p38 = scmp.eq.s32.totalorder %s17, 0
      %p39 = por %p37, %p38
      %s41 = sadd.s32 %s40, 1
      %p44 = scmp.eq.s32.totalorder %s11, 3
      %p45 = scmp.ne.s32.totalorder %s40, %s42
      %p46 = scmp.eq.s32.totalorder %s11, 0
      %p47 = por %p45, %p46
      %p48 = scmp.ne.s32.totalorder %s40, %s42
      %p49 = scmp.eq.s32.totalorder %s16, 3
      %p50 = por %p48, %p49
      %p51 = scmp.ne.s32.totalorder %s42, %s43
      %p52 = scmp.eq.s32.totalorder %s16, 0
      %p53 = por %p51, %p52
      %p54 = scmp.ne.s32.totalorder %s42, %s43
      %p55 = scmp.eq.s32.totalorder %s17, 3
      %p56 = por %p54, %p55
      %p58 = scmp.ne.s32.totalorder %s43, %s57
      %p59 = scmp.eq.s32.totalorder %s17, 0
      %p60 = por %p58, %p59
      %s61 = ssub.s32 %s11, %s18
      %p62 = scmp.eq.s32.totalorder %s61, 0
      %s64 = sadd.s32 %s63, 1
      %s65 = scalar_select %p62, %s63, %s64
      %p68 = pneg %p62
      %p69 = scmp.eq.s32.totalorder %s11, 3
      %p70 = por %p68, %p69
      %p71 = scmp.ne.s32.totalorder %s63, %s66
      %p72 = scmp.eq.s32.totalorder %s11, 0
      %p73 = por %p71, %p72
      %p74 = scmp.ne.s32.totalorder %s63, %s66
      %p75 = scmp.eq.s32.totalorder %s16, 3
      %p76 = por %p74, %p75
      %p77 = scmp.ne.s32.totalorder %s66, %s67
      %p78 = scmp.eq.s32.totalorder %s16, 0
      %p79 = por %p77, %p78
      %p80 = scmp.ne.s32.totalorder %s66, %s67
      %p81 = scmp.eq.s32.totalorder %s17, 3
      %p82 = por %p80, %p81
      %p84 = scmp.ne.s32.totalorder %s67, %s83
      %p85 = scmp.eq.s32.totalorder %s17, 0
      %p86 = por %p84, %p85
      %s87 = ssub.s32 %s11, %s18
      %p88 = scmp.eq.s32.totalorder %s87, 0
      %s90 = sadd.s32 %s89, 1
      %s91 = scalar_select %p88, %s89, %s90
      %p94 = pneg %p88
      %p95 = scmp.eq.s32.totalorder %s11, 3
      %p96 = por %p94, %p95
      %p97 = scmp.ne.s32.totalorder %s89, %s92
      %p98 = scmp.eq.s32.totalorder %s11, 0
      %p99 = por %p97, %p98
      %p100 = scmp.ne.s32.totalorder %s89, %s92
      %p101 = scmp.eq.s32.totalorder %s16, 3
      %p102 = por %p100, %p101
      %p103 = scmp.ne.s32.totalorder %s92, %s93
      %p104 = scmp.eq.s32.totalorder %s16, 0
      %p105 = por %p103, %p104
      %p106 = scmp.ne.s32.totalorder %s92, %s93
      %p107 = scmp.eq.s32.totalorder %s17, 3
      %p108 = por %p106, %p107
      %p110 = scmp.ne.s32.totalorder %s93, %s109
      %p111 = scmp.eq.s32.totalorder %s17, 0
      %p112 = por %p110, %p111
      %s113 = ssub.s32 %s11, %s18
      %p114 = scmp.eq.s32.totalorder %s113, 0
      %s116 = sadd.s32 %s115, 1
      %s117 = scalar_select %p114, %s115, %s116
      %p120 = pneg %p114
      %p121 = scmp.eq.s32.totalorder %s11, 3
      %p122 = por %p120, %p121
      %p123 = scmp.ne.s32.totalorder %s115, %s118
      %p124 = scmp.eq.s32.totalorder %s11, 0
      %p125 = por %p123, %p124
      %p126 = scmp.ne.s32.totalorder %s115, %s118
      %p127 = scmp.eq.s32.totalorder %s16, 3
      %p128 = por %p126, %p127
      %p129 = scmp.ne.s32.totalorder %s118, %s119
      %p130 = scmp.eq.s32.totalorder %s16, 0
      %p131 = por %p129, %p130
      %p132 = scmp.ne.s32.totalorder %s118, %s119
      %p133 = scmp.eq.s32.totalorder %s17, 3
      %p134 = por %p132, %p133
      %p136 = scmp.ne.s32.totalorder %s119, %s135
      %p137 = scmp.eq.s32.totalorder %s17, 0
      %p138 = por %p136, %p137
      %s139 = ssub.s32 %s11, %s18
      %p140 = scmp.eq.s32.totalorder %s139, 0
      %s142 = sadd.s32 %s141, 1
      %s143 = scalar_select %p140, %s141, %s142
      %p146 = pneg %p140
      %p147 = scmp.eq.s32.totalorder %s11, 3
      %p148 = por %p146, %p147
      %p149 = scmp.ne.s32.totalorder %s141, %s144
      %p150 = scmp.eq.s32.totalorder %s11, 0
      %p151 = por %p149, %p150
      %p152 = scmp.ne.s32.totalorder %s141, %s144
      %p153 = scmp.eq.s32.totalorder %s16, 3
      %p154 = por %p152, %p153
      %p155 = scmp.ne.s32.totalorder %s144, %s145
      %p156 = scmp.eq.s32.totalorder %s16, 0
      %p157 = por %p155, %p156
      %p158 = scmp.ne.s32.totalorder %s144, %s145
      %p159 = scmp.eq.s32.totalorder %s17, 3
      %p160 = por %p158, %p159
      %p162 = scmp.ne.s32.totalorder %s145, %s161
      %p163 = scmp.eq.s32.totalorder %s17, 0
      %p164 = por %p162, %p163
      %p165 = scmp.le.s32.totalorder 1, %s11
      %p166 = scmp.lt.s32.totalorder %s11, 5
      %p167 = pnand %p165, %p166
      %p168 = pneg %p167
      // Predicated region
      $region9: #{fwd.1} parent=5 // pred_check
        _
      $region10: #{fwd.1} parent=5 // pred_check_branch
        %170 = sbr.rel (%p167) target = $region12
      $region11: #{fwd.1} parent=5 // pred_region
        %s171 = ssub.s32 %s11, 1
        // Predicated region
        $region13: #{fwd.1} parent=11 // pred_check
          %p172 = pneg %p32
        $region14: #{fwd.1} parent=11 // pred_check_branch
          %174 = sbr.rel (%p172) target = $region16
        $region15: #{fwd.1} parent=11 // pred_region
          _
        $region16: #{fwd.1} parent=11 // pred_fallthru
          _
        // Predicated region
        $region17: #{fwd.1} parent=11 // pred_check
          %p175 = pneg %p53
        $region18: #{fwd.1} parent=11 // pred_check_branch
          %177 = sbr.rel (%p175) target = $region20
        $region19: #{fwd.1} parent=11 // pred_region
          _
        $region20: #{fwd.1} parent=11 // pred_fallthru
          _
      $region12: #{fwd.1} parent=5 // pred_fallthru
        _
      %p178 = scmp.lt.s32.totalorder %s11, 4
      // Predicated region
      $region21: #{fwd.1} parent=5 // pred_check
        %p179 = pneg %p178
      $region22: #{fwd.1} parent=5 // pred_check_branch
        %181 = sbr.rel (%p179) target = $region24
      $region23: #{fwd.1} parent=5 // pred_region
        // Predicated region
        $region25: #{fwd.1} parent=23 // pred_check
          %p182 = pneg %p73
        $region26: #{fwd.1} parent=23 // pred_check_branch
          %184 = sbr.rel (%p182) target = $region28
        $region27: #{fwd.1} parent=23 // pred_region
          %s185 = sand.u32 %s63, 1
          %s186 = sand.u32 %s63, 1
          %s187 = smul.addr %s186, 672
          %s188 = scalar_lea.vmem [#allocation2], %s187
          %s189 = smul.u32 3, %s11
          %s190 = smul.addr %s189, 8
          %s191 = scalar_lea.vmem %s2, %s190
          // Predicated region
          $region29: #{fwd.1} parent=27 // pred_check
            _
          $region30: #{fwd.1} parent=27 // pred_check_branch
            %193 = sbr.rel (0) target = $region32
          $region31: #{fwd.1} parent=27 // pred_region
            // Predicated region
            $region33: #{fwd.1} parent=31 // pred_check
              _
            $region34: #{fwd.1} parent=31 // pred_check_branch
              %195 = sbr.rel (0) target = $region36
            $region35: #{fwd.1} parent=31 // pred_region
              loop: start=0, step=1, limit=1
              $region37: #{fwd.1} parent=35 // loop_pre_header
                _
              $region38: #{fwd.1} parent=35 // loop_header
                %s197 = sphi 0, %s201
                %p198 = scmp.ge.s32.totalorder %s197, 1
                %s202 = sphi %s191, %s191
                %s203 = sphi %s188, %s188
              $region39: #{fwd.1} parent=35 // loop_header_branch
                %200 = sbr.rel (%p198) target = $region43
              $region40: #{fwd.1} parent=35 // loop_body
                %v204 = vld [vmem:[%s202] sm:$0xff]
                %205 = vst [vmem:[%s203] sm:$0xff] %v204
                %v206 = vld [vmem:[%s202 + $0x8] sm:$0xff]
                %207 = vst [vmem:[%s203 + $0x8] sm:$0xff] %v206
                %v208 = vld [vmem:[%s202 + $0x10] sm:$0xff]
                %209 = vst [vmem:[%s203 + $0x10] sm:$0xff] %v208
                %v210 = vld [vmem:[%s202 + $0x60] sm:$0xff]
                %211 = vst [vmem:[%s203 + $0x18] sm:$0xff] %v210
                %v212 = vld [vmem:[%s202 + $0x68] sm:$0xff]
                %213 = vst [vmem:[%s203 + $0x20] sm:$0xff] %v212
                %v214 = vld [vmem:[%s202 + $0x70] sm:$0xff]
                %215 = vst [vmem:[%s203 + $0x28] sm:$0xff] %v214
                %v216 = vld [vmem:[%s202 + $0xc0] sm:$0xff]
                %217 = vst [vmem:[%s203 + $0x30] sm:$0xff] %v216
                %v218 = vld [vmem:[%s202 + $0xc8] sm:$0xff]
                %219 = vst [vmem:[%s203 + $0x38] sm:$0xff] %v218
                %v220 = vld [vmem:[%s202 + $0xd0] sm:$0xff]
                %221 = vst [vmem:[%s203 + $0x40] sm:$0xff] %v220
                %v222 = vld [vmem:[%s202 + $0x120] sm:$0xff]
                %223 = vst [vmem:[%s203 + $0x48] sm:$0xff] %v222
                %v224 = vld [vmem:[%s202 + $0x128] sm:$0xff]
                %225 = vst [vmem:[%s203 + $0x50] sm:$0xff] %v224
                %v226 = vld [vmem:[%s202 + $0x130] sm:$0xff]
                %227 = vst [vmem:[%s203 + $0x58] sm:$0xff] %v226
                %v228 = vld [vmem:[%s202 + $0x180] sm:$0xff]
                %229 = vst [vmem:[%s203 + $0x60] sm:$0xff] %v228
                %v230 = vld [vmem:[%s202 + $0x188] sm:$0xff]
                %231 = vst [vmem:[%s203 + $0x68] sm:$0xff] %v230
                %v232 = vld [vmem:[%s202 + $0x190] sm:$0xff]
                %233 = vst [vmem:[%s203 + $0x70] sm:$0xff] %v232
                %v234 = vld [vmem:[%s202 + $0x1e0] sm:$0xff]
                %235 = vst [vmem:[%s203 + $0x78] sm:$0xff] %v234
                %v236 = vld [vmem:[%s202 + $0x1e8] sm:$0xff]
                %237 = vst [vmem:[%s203 + $0x80] sm:$0xff] %v236
                %v238 = vld [vmem:[%s202 + $0x1f0] sm:$0xff]
                %239 = vst [vmem:[%s203 + $0x88] sm:$0xff] %v238
                %v240 = vld [vmem:[%s202 + $0x240] sm:$0xff]
                %241 = vst [vmem:[%s203 + $0x90] sm:$0xff] %v240
                %v242 = vld [vmem:[%s202 + $0x248] sm:$0xff]
                %243 = vst [vmem:[%s203 + $0x98] sm:$0xff] %v242
                %v244 = vld [vmem:[%s202 + $0x250] sm:$0xff]
                %245 = vst [vmem:[%s203 + $0xa0] sm:$0xff] %v244
                %v246 = vld [vmem:[%s202 + $0x2a0] sm:$0xff]
                %247 = vst [vmem:[%s203 + $0xa8] sm:$0xff] %v246
                %v248 = vld [vmem:[%s202 + $0x2a8] sm:$0xff]
                %249 = vst [vmem:[%s203 + $0xb0] sm:$0xff] %v248
                %v250 = vld [vmem:[%s202 + $0x2b0] sm:$0xff]
                %251 = vst [vmem:[%s203 + $0xb8] sm:$0xff] %v250
                %v252 = vld [vmem:[%s202 + $0x300] sm:$0xff]
                %253 = vst [vmem:[%s203 + $0xc0] sm:$0xff] %v252
                %v254 = vld [vmem:[%s202 + $0x308] sm:$0xff]
                %255 = vst [vmem:[%s203 + $0xc8] sm:$0xff] %v254
                %v256 = vld [vmem:[%s202 + $0x310] sm:$0xff]
                %257 = vst [vmem:[%s203 + $0xd0] sm:$0xff] %v256
                %v258 = vld [vmem:[%s202 + $0x360] sm:$0xff]
                %259 = vst [vmem:[%s203 + $0xd8] sm:$0xff] %v258
                %v260 = vld [vmem:[%s202 + $0x368] sm:$0xff]
                %261 = vst [vmem:[%s203 + $0xe0] sm:$0xff] %v260
                %v262 = vld [vmem:[%s202 + $0x370] sm:$0xff]
                %263 = vst [vmem:[%s203 + $0xe8] sm:$0xff] %v262
                %v264 = vld [vmem:[%s202 + $0x3c0] sm:$0xff]
                %265 = vst [vmem:[%s203 + $0xf0] sm:$0xff] %v264
                %v266 = vld [vmem:[%s202 + $0x3c8] sm:$0xff]
                %267 = vst [vmem:[%s203 + $0xf8] sm:$0xff] %v266
                %v268 = vld [vmem:[%s202 + $0x3d0] sm:$0xff]
                %269 = vst [vmem:[%s203 + $0x100] sm:$0xff] %v268
                %v270 = vld [vmem:[%s202 + $0x420] sm:$0xff]
                %271 = vst [vmem:[%s203 + $0x108] sm:$0xff] %v270
                %v272 = vld [vmem:[%s202 + $0x428] sm:$0xff]
                %273 = vst [vmem:[%s203 + $0x110] sm:$0xff] %v272
                %v274 = vld [vmem:[%s202 + $0x430] sm:$0xff]
                %275 = vst [vmem:[%s203 + $0x118] sm:$0xff] %v274
                %v276 = vld [vmem:[%s202 + $0x480] sm:$0xff]
                %277 = vst [vmem:[%s203 + $0x120] sm:$0xff] %v276
                %v278 = vld [vmem:[%s202 + $0x488] sm:$0xff]
                %279 = vst [vmem:[%s203 + $0x128] sm:$0xff] %v278
                %v280 = vld [vmem:[%s202 + $0x490] sm:$0xff]
                %281 = vst [vmem:[%s203 + $0x130] sm:$0xff] %v280
                %v282 = vld [vmem:[%s202 + $0x4e0] sm:$0xff]
                %283 = vst [vmem:[%s203 + $0x138] sm:$0xff] %v282
                %v284 = vld [vmem:[%s202 + $0x4e8] sm:$0xff]
                %285 = vst [vmem:[%s203 + $0x140] sm:$0xff] %v284
                %v286 = vld [vmem:[%s202 + $0x4f0] sm:$0xff]
                %287 = vst [vmem:[%s203 + $0x148] sm:$0xff] %v286
                %v288 = vld [vmem:[%s202 + $0x540] sm:$0xff]
                %289 = vst [vmem:[%s203 + $0x150] sm:$0xff] %v288
                %v290 = vld [vmem:[%s202 + $0x548] sm:$0xff]
                %291 = vst [vmem:[%s203 + $0x158] sm:$0xff] %v290
                %v292 = vld [vmem:[%s202 + $0x550] sm:$0xff]
                %293 = vst [vmem:[%s203 + $0x160] sm:$0xff] %v292
                %v294 = vld [vmem:[%s202 + $0x5a0] sm:$0xff]
                %295 = vst [vmem:[%s203 + $0x168] sm:$0xff] %v294
                %v296 = vld [vmem:[%s202 + $0x5a8] sm:$0xff]
                %297 = vst [vmem:[%s203 + $0x170] sm:$0xff] %v296
                %v298 = vld [vmem:[%s202 + $0x5b0] sm:$0xff]
                %299 = vst [vmem:[%s203 + $0x178] sm:$0xff] %v298
                %v300 = vld [vmem:[%s202 + $0x600] sm:$0xff]
                %301 = vst [vmem:[%s203 + $0x180] sm:$0xff] %v300
                %v302 = vld [vmem:[%s202 + $0x608] sm:$0xff]
                %303 = vst [vmem:[%s203 + $0x188] sm:$0xff] %v302
                %v304 = vld [vmem:[%s202 + $0x610] sm:$0xff]
                %305 = vst [vmem:[%s203 + $0x190] sm:$0xff] %v304
                %v306 = vld [vmem:[%s202 + $0x660] sm:$0xff]
                %307 = vst [vmem:[%s203 + $0x198] sm:$0xff] %v306
                %v308 = vld [vmem:[%s202 + $0x668] sm:$0xff]
                %309 = vst [vmem:[%s203 + $0x1a0] sm:$0xff] %v308
                %v310 = vld [vmem:[%s202 + $0x670] sm:$0xff]
                %311 = vst [vmem:[%s203 + $0x1a8] sm:$0xff] %v310
                %v312 = vld [vmem:[%s202 + $0x6c0] sm:$0xff]
                %313 = vst [vmem:[%s203 + $0x1b0] sm:$0xff] %v312
                %v314 = vld [vmem:[%s202 + $0x6c8] sm:$0xff]
                %315 = vst [vmem:[%s203 + $0x1b8] sm:$0xff] %v314
                %v316 = vld [vmem:[%s202 + $0x6d0] sm:$0xff]
                %317 = vst [vmem:[%s203 + $0x1c0] sm:$0xff] %v316
                %v318 = vld [vmem:[%s202 + $0x720] sm:$0xff]
                %319 = vst [vmem:[%s203 + $0x1c8] sm:$0xff] %v318
                %v320 = vld [vmem:[%s202 + $0x728] sm:$0xff]
                %321 = vst [vmem:[%s203 + $0x1d0] sm:$0xff] %v320
                %v322 = vld [vmem:[%s202 + $0x730] sm:$0xff]
                %323 = vst [vmem:[%s203 + $0x1d8] sm:$0xff] %v322
                %v324 = vld [vmem:[%s202 + $0x780] sm:$0xff]
                %325 = vst [vmem:[%s203 + $0x1e0] sm:$0xff] %v324
                %v326 = vld [vmem:[%s202 + $0x788] sm:$0xff]
                %327 = vst [vmem:[%s203 + $0x1e8] sm:$0xff] %v326
                %v328 = vld [vmem:[%s202 + $0x790] sm:$0xff]
                %329 = vst [vmem:[%s203 + $0x1f0] sm:$0xff] %v328
                %v330 = vld [vmem:[%s202 + $0x7e0] sm:$0xff]
                %331 = vst [vmem:[%s203 + $0x1f8] sm:$0xff] %v330
                %v332 = vld [vmem:[%s202 + $0x7e8] sm:$0xff]
                %333 = vst [vmem:[%s203 + $0x200] sm:$0xff] %v332
                %v334 = vld [vmem:[%s202 + $0x7f0] sm:$0xff]
                %335 = vst [vmem:[%s203 + $0x208] sm:$0xff] %v334
                %v336 = vld [vmem:[%s202 + $0x840] sm:$0xff]
                %337 = vst [vmem:[%s203 + $0x210] sm:$0xff] %v336
                %v338 = vld [vmem:[%s202 + $0x848] sm:$0xff]
                %339 = vst [vmem:[%s203 + $0x218] sm:$0xff] %v338
                %v340 = vld [vmem:[%s202 + $0x850] sm:$0xff]
                %341 = vst [vmem:[%s203 + $0x220] sm:$0xff] %v340
                %v342 = vld [vmem:[%s202 + $0x8a0] sm:$0xff]
                %343 = vst [vmem:[%s203 + $0x228] sm:$0xff] %v342
                %v344 = vld [vmem:[%s202 + $0x8a8] sm:$0xff]
                %345 = vst [vmem:[%s203 + $0x230] sm:$0xff] %v344
                %v346 = vld [vmem:[%s202 + $0x8b0] sm:$0xff]
                %347 = vst [vmem:[%s203 + $0x238] sm:$0xff] %v346
                %v348 = vld [vmem:[%s202 + $0x900] sm:$0xff]
                %349 = vst [vmem:[%s203 + $0x240] sm:$0xff] %v348
                %v350 = vld [vmem:[%s202 + $0x908] sm:$0xff]
                %351 = vst [vmem:[%s203 + $0x248] sm:$0xff] %v350
                %v352 = vld [vmem:[%s202 + $0x910] sm:$0xff]
                %353 = vst [vmem:[%s203 + $0x250] sm:$0xff] %v352
                %v354 = vld [vmem:[%s202 + $0x960] sm:$0xff]
                %355 = vst [vmem:[%s203 + $0x258] sm:$0xff] %v354
                %v356 = vld [vmem:[%s202 + $0x968] sm:$0xff]
                %357 = vst [vmem:[%s203 + $0x260] sm:$0xff] %v356
                %v358 = vld [vmem:[%s202 + $0x970] sm:$0xff]
                %359 = vst [vmem:[%s203 + $0x268] sm:$0xff] %v358
                %v360 = vld [vmem:[%s202 + $0x9c0] sm:$0xff]
                %361 = vst [vmem:[%s203 + $0x270] sm:$0xff] %v360
                %v362 = vld [vmem:[%s202 + $0x9c8] sm:$0xff]
                %363 = vst [vmem:[%s203 + $0x278] sm:$0xff] %v362
                %v364 = vld [vmem:[%s202 + $0x9d0] sm:$0xff]
                %365 = vst [vmem:[%s203 + $0x280] sm:$0xff] %v364
                %v366 = vld [vmem:[%s202 + $0xa20] sm:$0xff]
                %367 = vst [vmem:[%s203 + $0x288] sm:$0xff] %v366
                %v368 = vld [vmem:[%s202 + $0xa28] sm:$0xff]
                %369 = vst [vmem:[%s203 + $0x290] sm:$0xff] %v368
                %v370 = vld [vmem:[%s202 + $0xa30] sm:$0xff]
                %371 = vst [vmem:[%s203 + $0x298] sm:$0xff] %v370
              $region41: #{fwd.1} parent=35 // loop_footer
                %s201 = sadd.s32 1, %s197
              $region42: #{fwd.1} parent=35 // loop_footer_branch
                %196 = sbr.rel target = $region38
              $region43: #{fwd.1} parent=35 // loop_exit
                _
            $region36: #{fwd.1} parent=31 // pred_fallthru
              _
            // Predicated region
            $region44: #{fwd.1} parent=31 // pred_check
              _
            $region45: #{fwd.1} parent=31 // pred_check_branch
              %373 = sbr.rel target = $region47
            $region46: #{fwd.1} parent=31 // pred_region
              _
            $region47: #{fwd.1} parent=31 // pred_fallthru
              _
          $region32: #{fwd.1} parent=27 // pred_fallthru
            _
          %374 = vnop
        $region28: #{fwd.1} parent=23 // pred_fallthru
          _
        // Predicated region
        $region48: #{fwd.1} parent=23 // pred_check
          %p375 = pneg %p99
        $region49: #{fwd.1} parent=23 // pred_check_branch
          %377 = sbr.rel (%p375) target = $region51
        $region50: #{fwd.1} parent=23 // pred_region
          %s378 = smul.u32 3, %s11
          %p379 = scmp.lt.s32.totalorder %s378, 11
          %s380 = scalar_select %p379, %s378, 11
          %s381 = scalar_lea.vmem %s3, %s380
          %s382 = smul.u32 3, %s11
        $region51: #{fwd.1} parent=23 // pred_fallthru
          _
        // Predicated region
        $region52: #{fwd.1} parent=23 // pred_check
          %p383 = pneg %p125
        $region53: #{fwd.1} parent=23 // pred_check_branch
          %385 = sbr.rel (%p383) target = $region55
        $region54: #{fwd.1} parent=23 // pred_region
          %s386 = sand.u32 %s115, 1
          %s387 = sand.u32 %s115, 1
          %s388 = smul.addr %s387, 24
          %s389 = scalar_lea.vmem [#allocation3], %s388
          %s390 = smul.addr %s11, 8
          %s391 = scalar_lea.vmem %s4, %s390
          // Predicated region
          $region56: #{fwd.1} parent=54 // pred_check
            _
          $region57: #{fwd.1} parent=54 // pred_check_branch
            %393 = sbr.rel (0) target = $region59
          $region58: #{fwd.1} parent=54 // pred_region
            // Predicated region
            $region60: #{fwd.1} parent=58 // pred_check
              _
            $region61: #{fwd.1} parent=58 // pred_check_branch
              %395 = sbr.rel (0) target = $region63
            $region62: #{fwd.1} parent=58 // pred_region
              // Predicated region
              $region75: #{fwd.1} parent=62 // pred_check
                _
              $region76: #{fwd.1} parent=62 // pred_check_branch
                %415 = sbr.rel (0) target = $region78
              $region77: #{fwd.1} parent=62 // pred_region
                loop: start=0, step=1, limit=1
                $region79: #{fwd.1} parent=77 // loop_pre_header
                  _
                $region80: #{fwd.1} parent=77 // loop_header
                  %s417 = sphi 0, %s421
                  %p418 = scmp.ge.s32.totalorder %s417, 1
                  %s422 = sphi %s391, %s391
                  %s423 = sphi %s389, %s389
                $region81: #{fwd.1} parent=77 // loop_header_branch
                  %420 = sbr.rel (%p418) target = $region85
                $region82: #{fwd.1} parent=77 // loop_body
                  %v424 = vld [vmem:[%s422] sm:$0xff]
                  %425 = vst [vmem:[%s423] sm:$0xff] %v424
                  %v426 = vld [vmem:[%s422 + $0x20] sm:$0xff]
                  %427 = vst [vmem:[%s423 + $0x8] sm:$0xff] %v426
                  %v428 = vld [vmem:[%s422 + $0x40] sm:$0xff]
                  %429 = vst [vmem:[%s423 + $0x10] sm:$0xff] %v428
                $region83: #{fwd.1} parent=77 // loop_footer
                  %s421 = sadd.s32 1, %s417
                $region84: #{fwd.1} parent=77 // loop_footer_branch
                  %416 = sbr.rel target = $region80
                $region85: #{fwd.1} parent=77 // loop_exit
                  _
              $region78: #{fwd.1} parent=62 // pred_fallthru
                _
              // Predicated region
              $region86: #{fwd.1} parent=62 // pred_check
                _
              $region87: #{fwd.1} parent=62 // pred_check_branch
                %431 = sbr.rel target = $region89
              $region88: #{fwd.1} parent=62 // pred_region
                _
              $region89: #{fwd.1} parent=62 // pred_fallthru
                _
            $region63: #{fwd.1} parent=58 // pred_fallthru
              _
            // Predicated region
            $region64: #{fwd.1} parent=58 // pred_check
              _
            $region65: #{fwd.1} parent=58 // pred_check_branch
              %397 = sbr.rel target = $region67
            $region66: #{fwd.1} parent=58 // pred_region
              %s399 = ssub.s32 256, 1
              loop: start=0, step=1, limit=1
              $region68: #{fwd.1} parent=66 // loop_pre_header
                _
              $region69: #{fwd.1} parent=66 // loop_header
                %s401 = sphi 0, %s405
                %p402 = scmp.ge.s32.totalorder %s401, 1
                %s406 = sphi %s391, %s391
                %s407 = sphi %s389, %s389
              $region70: #{fwd.1} parent=66 // loop_header_branch
                %404 = sbr.rel (%p402) target = $region74
              $region71: #{fwd.1} parent=66 // loop_body
                %v408 = vld [vmem:[%s406] sm:%s399]
                %409 = vst [vmem:[%s407] sm:%s399] %v408
                %v410 = vld [vmem:[%s406 + $0x20] sm:%s399]
                %411 = vst [vmem:[%s407 + $0x8] sm:%s399] %v410
                %v412 = vld [vmem:[%s406 + $0x40] sm:%s399]
                %413 = vst [vmem:[%s407 + $0x10] sm:%s399] %v412
              $region72: #{fwd.1} parent=66 // loop_footer
                %s405 = sadd.s32 1, %s401
              $region73: #{fwd.1} parent=66 // loop_footer_branch
                %400 = sbr.rel target = $region69
              $region74: #{fwd.1} parent=66 // loop_exit
                _
            $region67: #{fwd.1} parent=58 // pred_fallthru
              _
          $region59: #{fwd.1} parent=54 // pred_fallthru
            _
          %432 = vnop
        $region55: #{fwd.1} parent=23 // pred_fallthru
          _
      $region24: #{fwd.1} parent=5 // pred_fallthru
        _
      %p433 = scmp.le.s32.totalorder 1, %s11
      %p434 = scmp.lt.s32.totalorder %s11, 5
      %p435 = pnand %p433, %p434
      %p436 = pneg %p435
      // Predicated region
      $region90: #{fwd.1} parent=5 // pred_check
        _
      $region91: #{fwd.1} parent=5 // pred_check_branch
        %438 = sbr.rel (%p435) target = $region93
      $region92: #{fwd.1} parent=5 // pred_region
        %s439 = ssub.s32 %s11, 1
        %s440 = sand.u32 %s66, 1
        %s441 = sand.u32 %s66, 1
        %s442 = smul.addr %s441, 672
        %s443 = scalar_lea.vmem [#allocation2], %s442
        // Predicated region
        $region94: #{fwd.1} parent=92 // pred_check
          %p444 = pneg %p79
        $region95: #{fwd.1} parent=92 // pred_check_branch
          %446 = sbr.rel (%p444) target = $region97
        $region96: #{fwd.1} parent=92 // pred_region
          _
        $region97: #{fwd.1} parent=92 // pred_fallthru
          _
        %s447 = sand.u32 %s118, 1
        %s448 = sand.u32 %s118, 1
        %s449 = smul.addr %s448, 24
        %s450 = scalar_lea.vmem [#allocation3], %s449
        // Predicated region
        $region98: #{fwd.1} parent=92 // pred_check
          %p451 = pneg %p131
        $region99: #{fwd.1} parent=92 // pred_check_branch
          %453 = sbr.rel (%p451) target = $region101
        $region100: #{fwd.1} parent=92 // pred_region
          _
        $region101: #{fwd.1} parent=92 // pred_fallthru
          _
        %p454 = pneg %p32
        %p455 = pneg %p29
        %p456 = pneg %p53
        %p457 = pneg %p50
        %s458 = sand.u32 %s66, 1
        %s459 = sand.u32 %s66, 1
        %s460 = smul.addr %s459, 672
        %s461 = scalar_lea.vmem [#allocation2], %s460
        %p462 = pneg %p79
        %p463 = pneg %p76
        %s464 = smul.u32 3, %s16
        %p465 = scmp.lt.s32.totalorder %s464, 11
        %s466 = scalar_select %p465, %s464, 11
        %s467 = scalar_lea.vmem %s3, %s466
        %p468 = pneg %p105
        %p469 = pneg %p102
        %s470 = sand.u32 %s118, 1
        %s471 = sand.u32 %s118, 1
        %s472 = smul.addr %s471, 24
        %s473 = scalar_lea.vmem [#allocation3], %s472
        %p474 = pneg %p131
        %p475 = pneg %p128
        %p476 = pneg %p157
        %p477 = pneg %p154
        %s478 = sand.u32 %s144, 1
        %s479 = sand.u32 %s144, 1
        %s480 = smul.addr %s479, 24
        %s481 = scalar_lea.vmem [#allocation4], %s480
        %s482 = smul.u32 3, %s16
        %s483 = smul.u32 3, %s16
        %p484 = scmp.lt.s32.totalorder %s483, 11
        %s485 = scalar_select %p484, %s483, 11
        %s486 = scalar_lea.vmem %s3, %s485
        %s487 = smul.u32 3, %s16
        %v488 = vld [vmem:[%s0] sm:$0xff]
        %v489 = vld [vmem:[%s0 + $0x8] sm:$0xff]
        %v490 = vld [vmem:[%s443] sm:$0xff]
        %v491 = vld [vmem:[%s443 + $0x8] sm:$0xff]
        %v492 = vld [vmem:[%s443 + $0x10] sm:$0xff]
        %v493 = vld [vmem:[%s443 + $0x18] sm:$0xff]
        %v494 = vld [vmem:[%s443 + $0x20] sm:$0xff]
        %v495 = vld [vmem:[%s443 + $0x28] sm:$0xff]
        %v496 = vld [vmem:[%s443 + $0x30] sm:$0xff]
        %v497 = vld [vmem:[%s443 + $0x38] sm:$0xff]
        %v498 = vld [vmem:[%s443 + $0x40] sm:$0xff]
        %v499 = vld [vmem:[%s443 + $0x48] sm:$0xff]
        %v500 = vld [vmem:[%s443 + $0x50] sm:$0xff]
        %v501 = vld [vmem:[%s443 + $0x58] sm:$0xff]
        %v502 = vld [vmem:[%s443 + $0x60] sm:$0xff]
        %v503 = vld [vmem:[%s443 + $0x68] sm:$0xff]
        %v504 = vld [vmem:[%s443 + $0x70] sm:$0xff]
        %v505 = vld [vmem:[%s443 + $0x78] sm:$0xff]
        %v506 = vld [vmem:[%s443 + $0x80] sm:$0xff]
        %v507 = vld [vmem:[%s443 + $0x88] sm:$0xff]
        %v508 = vld [vmem:[%s443 + $0x90] sm:$0xff]
        %v509 = vld [vmem:[%s443 + $0x98] sm:$0xff]
        %v510 = vld [vmem:[%s443 + $0xa0] sm:$0xff]
        %v511 = vld [vmem:[%s443 + $0xa8] sm:$0xff]
        %v512 = vld [vmem:[%s443 + $0xb0] sm:$0xff]
        %v513 = vld [vmem:[%s443 + $0xb8] sm:$0xff]
        %v514 = vld [vmem:[%s443 + $0xc0] sm:$0xff]
        %v515 = vld [vmem:[%s443 + $0xc8] sm:$0xff]
        %v516 = vld [vmem:[%s443 + $0xd0] sm:$0xff]
        %v517 = vld [vmem:[%s443 + $0xd8] sm:$0xff]
        %v518 = vld [vmem:[%s443 + $0xe0] sm:$0xff]
        %v519 = vld [vmem:[%s443 + $0xe8] sm:$0xff]
        %v520 = vld [vmem:[%s443 + $0xf0] sm:$0xff]
        %v521 = vld [vmem:[%s443 + $0xf8] sm:$0xff]
        %v522 = vld [vmem:[%s443 + $0x100] sm:$0xff]
        %v523 = vld [vmem:[%s443 + $0x108] sm:$0xff]
        %v524 = vld [vmem:[%s443 + $0x110] sm:$0xff]
        %v525 = vld [vmem:[%s443 + $0x118] sm:$0xff]
        %v526 = vld [vmem:[%s443 + $0x120] sm:$0xff]
        %v527 = vld [vmem:[%s443 + $0x128] sm:$0xff]
        %v528 = vld [vmem:[%s443 + $0x130] sm:$0xff]
        %v529 = vld [vmem:[%s443 + $0x138] sm:$0xff]
        %v530 = vld [vmem:[%s443 + $0x140] sm:$0xff]
        %v531 = vld [vmem:[%s443 + $0x148] sm:$0xff]
        %v532 = vld [vmem:[%s443 + $0x150] sm:$0xff]
        %v533 = vld [vmem:[%s443 + $0x158] sm:$0xff]
        %v534 = vld [vmem:[%s443 + $0x160] sm:$0xff]
        %v535 = vld [vmem:[%s443 + $0x168] sm:$0xff]
        %v536 = vld [vmem:[%s443 + $0x170] sm:$0xff]
        %v537 = vld [vmem:[%s443 + $0x178] sm:$0xff]
        %v538 = vld [vmem:[%s443 + $0x180] sm:$0xff]
        %v539 = vld [vmem:[%s443 + $0x188] sm:$0xff]
        %v540 = vld [vmem:[%s443 + $0x190] sm:$0xff]
        %v541 = vld [vmem:[%s443 + $0x198] sm:$0xff]
        %v542 = vld [vmem:[%s443 + $0x1a0] sm:$0xff]
        %v543 = vld [vmem:[%s443 + $0x1a8] sm:$0xff]
        %v544 = vld [vmem:[%s443 + $0x1b0] sm:$0xff]
        %v545 = vld [vmem:[%s443 + $0x1b8] sm:$0xff]
        %v546 = vld [vmem:[%s443 + $0x1c0] sm:$0xff]
        %v547 = vld [vmem:[%s443 + $0x1c8] sm:$0xff]
        %v548 = vld [vmem:[%s443 + $0x1d0] sm:$0xff]
        %v549 = vld [vmem:[%s443 + $0x1d8] sm:$0xff]
        %v550 = vld [vmem:[%s443 + $0x1e0] sm:$0xff]
        %v551 = vld [vmem:[%s443 + $0x1e8] sm:$0xff]
        %v552 = vld [vmem:[%s443 + $0x1f0] sm:$0xff]
        %v553 = vld [vmem:[%s443 + $0x1f8] sm:$0xff]
        %v554 = vld [vmem:[%s443 + $0x200] sm:$0xff]
        %v555 = vld [vmem:[%s443 + $0x208] sm:$0xff]
        %v556 = vld [vmem:[%s443 + $0x210] sm:$0xff]
        %v557 = vld [vmem:[%s443 + $0x218] sm:$0xff]
        %v558 = vld [vmem:[%s443 + $0x220] sm:$0xff]
        %v559 = vld [vmem:[%s443 + $0x228] sm:$0xff]
        %v560 = vld [vmem:[%s443 + $0x230] sm:$0xff]
        %v561 = vld [vmem:[%s443 + $0x238] sm:$0xff]
        %v562 = vld [vmem:[%s443 + $0x240] sm:$0xff]
        %v563 = vld [vmem:[%s443 + $0x248] sm:$0xff]
        %v564 = vld [vmem:[%s443 + $0x250] sm:$0xff]
        %v565 = vld [vmem:[%s443 + $0x258] sm:$0xff]
        %v566 = vld [vmem:[%s443 + $0x260] sm:$0xff]
        %v567 = vld [vmem:[%s443 + $0x268] sm:$0xff]
        %v568 = vld [vmem:[%s443 + $0x270] sm:$0xff]
        %v569 = vld [vmem:[%s443 + $0x278] sm:$0xff]
        %v570 = vld [vmem:[%s443 + $0x280] sm:$0xff]
        %v571 = vld [vmem:[%s443 + $0x288] sm:$0xff]
        %v572 = vld [vmem:[%s443 + $0x290] sm:$0xff]
        %v573 = vld [vmem:[%s443 + $0x298] sm:$0xff]
        %v574 = vld [vmem:[%s486] sm:$0x7]
        %v576 = vperm.slane %v574, 0
        %v577 = vperm.slane %v574, 1
        %v578 = vperm.slane %v574, 2
        %vm582 = vcmask 785408
        %v584 = vsel %vm582, %v489, 0
        %586 = vmatpush.msra.mxu0 %v535
        %587 = vmatpush.msra.mxu0 %v532
        %588 = vmatpush.msra.mxu0 %v529
        %589 = vmatpush.msra.mxu0 %v526
        %590 = vmatpush.msra.mxu0 %v523
        %591 = vmatpush.msra.mxu0 %v520
        %592 = vmatpush.msra.mxu0 %v517
        %593 = vmatpush.msra.mxu0 %v514
        %594 = vmatpush.msra.mxu0 %v511
        %595 = vmatpush.msra.mxu0 %v508
        %596 = vmatpush.msra.mxu0 %v505
        %597 = vmatpush.msra.mxu0 %v502
        %598 = vmatpush.msra.mxu0 %v499
        %599 = vmatpush.msra.mxu0 %v496
        %600 = vmatpush.msra.mxu0 %v493
        %601 = vmatpush.msra.mxu0 %v490
        %602 = vmatmul.f32.gmra.mxu0 %v488
        %v603 = vpop.f32.mrf.mxu0
        %v604 = vadd.f32 %v576, %v603
        %605 = vdwg.mxu0
        %606 = vmatpush.msra.mxu0 0.0
        %607 = vmatpush.msra.mxu0 0.0
        %608 = vmatpush.msra.mxu0 0.0
        %609 = vmatpush.msra.mxu0 0.0
        %610 = vmatpush.msra.mxu0 %v571
        %611 = vmatpush.msra.mxu0 %v568
        %612 = vmatpush.msra.mxu0 %v565
        %613 = vmatpush.msra.mxu0 %v562
        %614 = vmatpush.msra.mxu0 %v559
        %615 = vmatpush.msra.mxu0 %v556
        %616 = vmatpush.msra.mxu0 %v553
        %617 = vmatpush.msra.mxu0 %v550
        %618 = vmatpush.msra.mxu0 %v547
        %619 = vmatpush.msra.mxu0 %v544
        %620 = vmatpush.msra.mxu0 %v541
        %621 = vmatpush.msra.mxu0 %v538
        %622 = vmatmul.f32.gmra.mxu0 %v584
        %v623 = vpop.f32.mrf.mxu0
        %v624 = vadd.f32 %v604, %v623
        %625 = vdwg.mxu0
        %626 = vmatpush.msra.mxu0 %v536
        %627 = vmatpush.msra.mxu0 %v533
        %628 = vmatpush.msra.mxu0 %v530
        %629 = vmatpush.msra.mxu0 %v527
        %630 = vmatpush.msra.mxu0 %v524
        %631 = vmatpush.msra.mxu0 %v521
        %632 = vmatpush.msra.mxu0 %v518
        %633 = vmatpush.msra.mxu0 %v515
        %634 = vmatpush.msra.mxu0 %v512
        %635 = vmatpush.msra.mxu0 %v509
        %636 = vmatpush.msra.mxu0 %v506
        %637 = vmatpush.msra.mxu0 %v503
        %638 = vmatpush.msra.mxu0 %v500
        %639 = vmatpush.msra.mxu0 %v497
        %640 = vmatpush.msra.mxu0 %v494
        %641 = vmatpush.msra.mxu0 %v491
        %642 = vmatmul.f32.gmra.mxu0 %v488
        %v643 = vpop.f32.mrf.mxu0
        %v644 = vadd.f32 %v577, %v643
        %645 = vdwg.mxu0
        %646 = vmatpush.msra.mxu0 0.0
        %647 = vmatpush.msra.mxu0 0.0
        %648 = vmatpush.msra.mxu0 0.0
        %649 = vmatpush.msra.mxu0 0.0
        %650 = vmatpush.msra.mxu0 %v572
        %651 = vmatpush.msra.mxu0 %v569
        %652 = vmatpush.msra.mxu0 %v566
        %653 = vmatpush.msra.mxu0 %v563
        %654 = vmatpush.msra.mxu0 %v560
        %655 = vmatpush.msra.mxu0 %v557
        %656 = vmatpush.msra.mxu0 %v554
        %657 = vmatpush.msra.mxu0 %v551
        %658 = vmatpush.msra.mxu0 %v548
        %659 = vmatpush.msra.mxu0 %v545
        %660 = vmatpush.msra.mxu0 %v542
        %661 = vmatpush.msra.mxu0 %v539
        %662 = vmatmul.f32.gmra.mxu0 %v584
        %v663 = vpop.f32.mrf.mxu0
        %v664 = vadd.f32 %v644, %v663
        %665 = vdwg.mxu0
        %666 = vmatpush.msra.mxu0 %v537
        %667 = vmatpush.msra.mxu0 %v534
        %668 = vmatpush.msra.mxu0 %v531
        %669 = vmatpush.msra.mxu0 %v528
        %670 = vmatpush.msra.mxu0 %v525
        %671 = vmatpush.msra.mxu0 %v522
        %672 = vmatpush.msra.mxu0 %v519
        %673 = vmatpush.msra.mxu0 %v516
        %674 = vmatpush.msra.mxu0 %v513
        %675 = vmatpush.msra.mxu0 %v510
        %676 = vmatpush.msra.mxu0 %v507
        %677 = vmatpush.msra.mxu0 %v504
        %678 = vmatpush.msra.mxu0 %v501
        %679 = vmatpush.msra.mxu0 %v498
        %680 = vmatpush.msra.mxu0 %v495
        %681 = vmatpush.msra.mxu0 %v492
        %682 = vmatmul.f32.gmra.mxu0 %v488
        %v683 = vpop.f32.mrf.mxu0
        %v684 = vadd.f32 %v578, %v683
        %685 = vdwg.mxu0
        %686 = vmatpush.msra.mxu0 0.0
        %687 = vmatpush.msra.mxu0 0.0
        %688 = vmatpush.msra.mxu0 0.0
        %689 = vmatpush.msra.mxu0 0.0
        %690 = vmatpush.msra.mxu0 %v573
        %691 = vmatpush.msra.mxu0 %v570
        %692 = vmatpush.msra.mxu0 %v567
        %693 = vmatpush.msra.mxu0 %v564
        %694 = vmatpush.msra.mxu0 %v561
        %695 = vmatpush.msra.mxu0 %v558
        %696 = vmatpush.msra.mxu0 %v555
        %697 = vmatpush.msra.mxu0 %v552
        %698 = vmatpush.msra.mxu0 %v549
        %699 = vmatpush.msra.mxu0 %v546
        %700 = vmatpush.msra.mxu0 %v543
        %701 = vmatpush.msra.mxu0 %v540
        %702 = vmatmul.f32.gmra.mxu0 %v584
        %v703 = vpop.f32.mrf.mxu0
        %v704 = vadd.f32 %v684, %v703
        %705 = vdwg.mxu0
        %v706 = vld [vmem:[%s1] sm:$0xff]
        %v707 = vld [vmem:[%s1 + $0x8] sm:$0xff]
        %v708 = vld [vmem:[%s1 + $0x10] sm:$0xff]
        %v709 = vld [vmem:[%s1 + $0x18] sm:$0xff]
        %v710 = vld [vmem:[%s1 + $0x20] sm:$0xff]
        %v711 = vld [vmem:[%s1 + $0x28] sm:$0xff]
        %v712 = vld [vmem:[%s1 + $0x30] sm:$0xff]
        %v713 = vld [vmem:[%s1 + $0x38] sm:$0xff]
        %v714 = vld [vmem:[%s1 + $0x40] sm:$0xff]
        %v715 = vld [vmem:[%s1 + $0x48] sm:$0xff]
        %v716 = vld [vmem:[%s1 + $0x50] sm:$0xff]
        %v717 = vld [vmem:[%s1 + $0x58] sm:$0xff]
        %v718 = vld [vmem:[%s450] sm:$0xff]
        %v719 = vld [vmem:[%s450 + $0x8] sm:$0xff]
        %v720 = vld [vmem:[%s450 + $0x10] sm:$0xff]
        %vm721 = vcmask 195584
        %v723 = vsel %vm721, %v706, 0
        %v726 = vsel %vm721, %v707, 0
        %v729 = vsel %vm721, %v708, 0
        %v732 = vsel %vm721, %v709, 0
        %v735 = vsel %vm721, %v710, 0
        %v738 = vsel %vm721, %v711, 0
        %v741 = vsel %vm721, %v712, 0
        %v744 = vsel %vm721, %v713, 0
        %v747 = vsel %vm721, %v714, 0
        %v750 = vsel %vm721, %v715, 0
        %v753 = vsel %vm721, %v716, 0
        %v756 = vsel %vm721, %v717, 0
        %758 = vmatpush.msra.mxu0 0.0
        %759 = vmatpush.msra.mxu0 0.0
        %760 = vmatpush.msra.mxu0 0.0
        %761 = vmatpush.msra.mxu0 0.0
        %762 = vmatpush.msra.mxu0 0.0
        %763 = vmatpush.msra.mxu0 0.0
        %764 = vmatpush.msra.mxu0 0.0
        %765 = vmatpush.msra.mxu0 0.0
        %766 = vmatpush.msra.mxu0 0.0
        %767 = vmatpush.msra.mxu0 0.0
        %768 = vmatpush.msra.mxu0 0.0
        %769 = vmatpush.msra.mxu0 0.0
        %770 = vmatpush.msra.mxu0 0.0
        %771 = vmatpush.msra.mxu0 %v720
        %772 = vmatpush.msra.mxu0 %v719
        %773 = vmatpush.msra.mxu0 %v718
        %774 = vmatmul.f32.gmra.mxu0 %v723
        %v775 = vpop.f32.mrf.mxu0
        %v776 = vadd.f32 0.0, %v775
        %777 = vmatmul.f32.gmra.mxu0 %v726
        %v778 = vpop.f32.mrf.mxu0
        %v779 = vadd.f32 0.0, %v778
        %780 = vmatmul.f32.gmra.mxu0 %v729
        %v781 = vpop.f32.mrf.mxu0
        %v782 = vadd.f32 0.0, %v781
        %783 = vmatmul.f32.gmra.mxu0 %v732
        %v784 = vpop.f32.mrf.mxu0
        %v785 = vadd.f32 0.0, %v784
        %786 = vmatmul.f32.gmra.mxu0 %v735
        %v787 = vpop.f32.mrf.mxu0
        %v788 = vadd.f32 0.0, %v787
        %789 = vmatmul.f32.gmra.mxu0 %v738
        %v790 = vpop.f32.mrf.mxu0
        %v791 = vadd.f32 0.0, %v790
        %792 = vmatmul.f32.gmra.mxu0 %v741
        %v793 = vpop.f32.mrf.mxu0
        %v794 = vadd.f32 0.0, %v793
        %795 = vmatmul.f32.gmra.mxu0 %v744
        %v796 = vpop.f32.mrf.mxu0
        %v797 = vadd.f32 0.0, %v796
        %798 = vmatmul.f32.gmra.mxu0 %v747
        %v799 = vpop.f32.mrf.mxu0
        %v800 = vadd.f32 0.0, %v799
        %801 = vmatmul.f32.gmra.mxu0 %v750
        %v802 = vpop.f32.mrf.mxu0
        %v803 = vadd.f32 0.0, %v802
        %804 = vmatmul.f32.gmra.mxu0 %v753
        %v805 = vpop.f32.mrf.mxu0
        %v806 = vadd.f32 0.0, %v805
        %807 = vmatmul.f32.gmra.mxu0 %v756
        %v808 = vpop.f32.mrf.mxu0
        %v809 = vadd.f32 0.0, %v808
        %810 = vdwg.mxu0
        %v811 = vmul.f32 %v776, %v624
        %v812 = vmul.f32 %v779, %v664
        %v813 = vadd.f32 %v811, %v812
        %v814 = vmul.f32 %v782, %v704
        %v815 = vadd.f32 %v813, %v814
        %v816 = vadd.f32 %v815, %v785
        %817 = vst [vmem:[%s481] sm:$0xff] %v816
        %v818 = vmul.f32 %v788, %v624
        %v819 = vmul.f32 %v791, %v664
        %v820 = vadd.f32 %v818, %v819
        %v821 = vmul.f32 %v794, %v704
        %v822 = vadd.f32 %v820, %v821
        %v823 = vadd.f32 %v822, %v797
        %s824 = scalar_lea.vmem %s481, 8 [#allocation4]
        %825 = vst [vmem:[%s824] sm:$0xff] %v823
        %v826 = vmul.f32 %v800, %v624
        %v827 = vmul.f32 %v803, %v664
        %v828 = vadd.f32 %v826, %v827
        %v829 = vmul.f32 %v806, %v704
        %v830 = vadd.f32 %v828, %v829
        %v831 = vadd.f32 %v830, %v809
        %s832 = scalar_lea.vmem %s481, 16 [#allocation4]
        %833 = vst [vmem:[%s832] sm:$0xff] %v831
        %s834 = sand.u32 %s144, 1
        %s835 = sand.u32 %s144, 1
        %s836 = smul.addr %s835, 24
        %s837 = scalar_lea.vmem [#allocation4], %s836
        // Predicated region
        $region102: #{fwd.1} parent=92 // pred_check
          %p838 = pneg %p154
        $region103: #{fwd.1} parent=92 // pred_check_branch
          %840 = sbr.rel (%p838) target = $region105
        $region104: #{fwd.1} parent=92 // pred_region
          %s841 = smul.addr %s16, 8
          %s842 = scalar_lea.vmem %s5, %s841
          // Predicated region
          $region106: #{fwd.1} parent=104 // pred_check
            _
          $region107: #{fwd.1} parent=104 // pred_check_branch
            %844 = sbr.rel (0) target = $region109
          $region108: #{fwd.1} parent=104 // pred_region
            // Predicated region
            $region110: #{fwd.1} parent=108 // pred_check
              _
            $region111: #{fwd.1} parent=108 // pred_check_branch
              %846 = sbr.rel (0) target = $region113
            $region112: #{fwd.1} parent=108 // pred_region
              // Predicated region
              $region125: #{fwd.1} parent=112 // pred_check
                _
              $region126: #{fwd.1} parent=112 // pred_check_branch
                %866 = sbr.rel (0) target = $region128
              $region127: #{fwd.1} parent=112 // pred_region
                loop: start=0, step=1, limit=1
                $region129: #{fwd.1} parent=127 // loop_pre_header
                  _
                $region130: #{fwd.1} parent=127 // loop_header
                  %s868 = sphi 0, %s872
                  %p869 = scmp.ge.s32.totalorder %s868, 1
                  %s873 = sphi %s837, %s837
                  %s874 = sphi %s842, %s842
                $region131: #{fwd.1} parent=127 // loop_header_branch
                  %871 = sbr.rel (%p869) target = $region135
                $region132: #{fwd.1} parent=127 // loop_body
                  %v875 = vld [vmem:[%s873] sm:$0xff]
                  %876 = vst [vmem:[%s874] sm:$0xff] %v875
                  %v877 = vld [vmem:[%s873 + $0x8] sm:$0xff]
                  %878 = vst [vmem:[%s874 + $0x20] sm:$0xff] %v877
                  %v879 = vld [vmem:[%s873 + $0x10] sm:$0xff]
                  %880 = vst [vmem:[%s874 + $0x40] sm:$0xff] %v879
                $region133: #{fwd.1} parent=127 // loop_footer
                  %s872 = sadd.s32 1, %s868
                $region134: #{fwd.1} parent=127 // loop_footer_branch
                  %867 = sbr.rel target = $region130
                $region135: #{fwd.1} parent=127 // loop_exit
                  _
              $region128: #{fwd.1} parent=112 // pred_fallthru
                _
              // Predicated region
              $region136: #{fwd.1} parent=112 // pred_check
                _
              $region137: #{fwd.1} parent=112 // pred_check_branch
                %882 = sbr.rel target = $region139
              $region138: #{fwd.1} parent=112 // pred_region
                _
              $region139: #{fwd.1} parent=112 // pred_fallthru
                _
            $region113: #{fwd.1} parent=108 // pred_fallthru
              _
            // Predicated region
            $region114: #{fwd.1} parent=108 // pred_check
              _
            $region115: #{fwd.1} parent=108 // pred_check_branch
              %848 = sbr.rel target = $region117
            $region116: #{fwd.1} parent=108 // pred_region
              %s850 = ssub.s32 256, 1
              loop: start=0, step=1, limit=1
              $region118: #{fwd.1} parent=116 // loop_pre_header
                _
              $region119: #{fwd.1} parent=116 // loop_header
                %s852 = sphi 0, %s856
                %p853 = scmp.ge.s32.totalorder %s852, 1
                %s857 = sphi %s837, %s837
                %s858 = sphi %s842, %s842
              $region120: #{fwd.1} parent=116 // loop_header_branch
                %855 = sbr.rel (%p853) target = $region124
              $region121: #{fwd.1} parent=116 // loop_body
                %v859 = vld [vmem:[%s857] sm:%s850]
                %860 = vst [vmem:[%s858] sm:%s850] %v859
                %v861 = vld [vmem:[%s857 + $0x8] sm:%s850]
                %862 = vst [vmem:[%s858 + $0x20] sm:%s850] %v861
                %v863 = vld [vmem:[%s857 + $0x10] sm:%s850]
                %864 = vst [vmem:[%s858 + $0x40] sm:%s850] %v863
              $region122: #{fwd.1} parent=116 // loop_footer
                %s856 = sadd.s32 1, %s852
              $region123: #{fwd.1} parent=116 // loop_footer_branch
                %851 = sbr.rel target = $region119
              $region124: #{fwd.1} parent=116 // loop_exit
                _
            $region117: #{fwd.1} parent=108 // pred_fallthru
              _
          $region109: #{fwd.1} parent=104 // pred_fallthru
            _
          %883 = vnop
        $region105: #{fwd.1} parent=92 // pred_fallthru
          _
      $region93: #{fwd.1} parent=5 // pred_fallthru
        _
      %p884 = scmp.le.s32.totalorder 2, %s11
      // Predicated region
      $region140: #{fwd.1} parent=5 // pred_check
        %p885 = pneg %p884
      $region141: #{fwd.1} parent=5 // pred_check_branch
        %887 = sbr.rel (%p885) target = $region143
      $region142: #{fwd.1} parent=5 // pred_region
        %s888 = ssub.s32 %s11, 2
        // Predicated region
        $region144: #{fwd.1} parent=142 // pred_check
          %p889 = pneg %p160
        $region145: #{fwd.1} parent=142 // pred_check_branch
          %891 = sbr.rel (%p889) target = $region147
        $region146: #{fwd.1} parent=142 // pred_region
          %s892 = sand.u32 %s145, 1
          %s893 = sand.u32 %s145, 1
          %s894 = smul.addr %s893, 24
          %s895 = scalar_lea.vmem [#allocation4], %s894
        $region147: #{fwd.1} parent=142 // pred_fallthru
          _
      $region143: #{fwd.1} parent=5 // pred_fallthru
        _
    $region6: #{fwd.1} parent=1 // loop_footer
      %s15 = sadd.s32 1, %s11
    $region7: #{fwd.1} parent=1 // loop_footer_branch
      %10 = sbr.rel target = $region3
    $region8: #{fwd.1} parent=1 // loop_exit
      _

</llo_original>
